<compile_context>
chip_gen: v5e
topology: v5e:2x2
jax: 0.10.0
libtpu: 0.0.40
codegen_flags: <defaults>
</compile_context>

<pallas_src>
from functools import partial

import jax
import jax.numpy as jnp
from jax import lax
from jax.experimental import pallas as pl
from jax.experimental.pallas import tpu as pltpu


def _fused_mha_kernel(x_ref, wqkv_ref, o_ref, *, num_heads, d_out):
    # x_ref    : (T, d_in)          bf16 -- current batch element
    # wqkv_ref : (d_in, 3*H*d_out)  bf16 -- stacked [Q_all | K_all | V_all], Q pre-scaled
    # o_ref    : (T, H*d_out)       f32  -- concatenated per-head outputs for this batch
    T = x_ref.shape[0]
    H = num_heads

    # ---- QKV projection: ONE wide bf16 MXU matmul, f32 accumulation ----------------
    qkv = jnp.dot(x_ref[...], wqkv_ref[...],
                  preferred_element_type=jnp.float32)            # (T, 3*H*d_out) f32

    # ---- single relayout to head-batched layout (3*H, T, d_out) --------------------
    qkv = jnp.transpose(qkv.reshape(T, 3 * H, d_out), (1, 0, 2))  # (3H, T, d_out)
    q = qkv[:H].astype(jnp.bfloat16)          # 1/sqrt(d_out) already folded into Wq
    k = qkv[H:2 * H].astype(jnp.bfloat16)
    v = qkv[2 * H:].astype(jnp.bfloat16)

    # ---- causal mask, built once per grid step (additive finite sentinel) ----------
    row = lax.broadcasted_iota(jnp.int32, (T, T), 0)
    col = lax.broadcasted_iota(jnp.int32, (T, T), 1)
    mask_add = jnp.where(col > row, jnp.float32(-1e30), jnp.float32(0.0))   # (T, T)

    # ---- head-batched attention: QK^T, f32 softmax, P@V ----------------------------
    s = jnp.einsum('htd,hsd->hts', q, k,
                   preferred_element_type=jnp.float32)           # (H, T, T) f32
    s = s + mask_add                                             # broadcast over heads
    m = jnp.max(s, axis=-1, keepdims=True)
    e = jnp.exp(s - m)
    p = e * pl.reciprocal(jnp.sum(e, axis=-1, keepdims=True), approx=True)

    o = jnp.einsum('hts,hsd->htd', p.astype(jnp.bfloat16), v,
                   preferred_element_type=jnp.float32)           # (H, T, d_out) f32

    # ---- assemble concatenated (T, H*d_out) tile; single full-tile store -----------
    o_ref[...] = jnp.transpose(o, (1, 0, 2)).reshape(T, H * d_out).astype(o_ref.dtype)


def prepare_qkv_weights(wq, wk, wv, dtype=jnp.bfloat16):
    """One-time weight prep (do when weights are created, NOT per forward).

    (H, d_in, d_out) x3 -> (d_in, 3*H*d_out) stacked [Q_all | K_all | V_all],
    with the 1/sqrt(d_out) attention scale folded into the Q columns and the
    slab cast to bf16 for MXU-peak matmuls on all TPU generations.
    """
    H, d_in, d_out = wq.shape
    scale = 1.0 / (float(d_out) ** 0.5)

    def flat(w):  # (H, d_in, d_out) -> (d_in, H*d_out); head h at cols h*d_out:(h+1)*d_out
        return jnp.transpose(w, (1, 0, 2)).reshape(d_in, H * d_out)

    return jnp.concatenate([flat(wq) * scale, flat(wk), flat(wv)], axis=-1).astype(dtype)


def multi_head_attention_wrapper(x, w_qkv, num_heads, d_out):
    """
    x      : (B, T, d_in) float32
    w_qkv  : (d_in, 3*H*d_out) bf16, from prepare_qkv_weights (scale pre-folded)
    returns (B, T, H*d_out) float32, matching torch.cat([head(x) for head in heads], -1)
    """
    B, T, d_in = x.shape
    hd = num_heads * d_out

    kernel = partial(_fused_mha_kernel, num_heads=num_heads, d_out=d_out)

    return pl.pallas_call(
        kernel,
        out_shape=jax.ShapeDtypeStruct((B, T, hd), jnp.float32),
        grid_spec=pltpu.PrefetchScalarGridSpec(
            num_scalar_prefetch=0,
            grid=(B,),
            in_specs=[
                # x: one batch element, full (T, d_in) tile (bf16 halves DMA bytes)
                pl.BlockSpec((None, T, d_in), lambda b: (b, 0, 0)),
                # stacked QKV weights: constant block index -> stays resident (no re-DMA)
                pl.BlockSpec((d_in, 3 * hd), lambda b: (0, 0)),
            ],
            # concatenated output written directly by the kernel, one store per step
            out_specs=pl.BlockSpec((None, T, hd), lambda b: (b, 0, 0)),
        ),
        compiler_params=pltpu.CompilerParams(
            dimension_semantics=("parallel",),      # v7x: two TensorCores split the batch
            vmem_limit_bytes=32 * 1024 * 1024,      # explicit budget (v7x has 64 MiB VMEM)
        ),
    )(x.astype(jnp.bfloat16), w_qkv)


def _reference(x, wq, wk, wv):
    """Pure-JAX f32 reference of the PyTorch forward (eval mode, dropout=0)."""
    B, T, d_in = x.shape
    H, _, d_out = wq.shape
    outs = []
    mask = jnp.triu(jnp.ones((T, T), dtype=bool), k=1)
    for h in range(H):
        q = x @ wq[h]
        k = x @ wk[h]
        v = x @ wv[h]
        scores = q @ jnp.swapaxes(k, 1, 2)
        scores = jnp.where(mask[None], -jnp.inf, scores)
        w = jax.nn.softmax(scores / (d_out ** 0.5), axis=-1)
        outs.append(w @ v)
    return jnp.concatenate(outs, axis=-1)


if __name__ == "__main__":
    # Module hyper-params: d_in=32, d_out=16 per head, context_length=8,
    # dropout=0.0, num_heads=4, qkv_bias=False
    B, T, d_in, d_out, H = 2, 8, 32, 16, 4

    key = jax.random.PRNGKey(0)
    kx, kq, kk, kv = jax.random.split(key, 4)

    x = jax.random.normal(kx, (B, T, d_in), dtype=jnp.float32)
    # Deterministic synthetic "nn.Linear" weights (stored as (d_in, d_out) so y = x @ W)
    wq = jax.random.normal(kq, (H, d_in, d_out), dtype=jnp.float32) * 0.05
    wk = jax.random.normal(kk, (H, d_in, d_out), dtype=jnp.float32) * 0.05
    wv = jax.random.normal(kv, (H, d_in, d_out), dtype=jnp.float32) * 0.05

    # One-time weight prep (outside the per-forward path): stack + fold scale + bf16.
    w_qkv = prepare_qkv_weights(wq, wk, wv)

    out = multi_head_attention_wrapper(x, w_qkv, H, d_out)
    out = jax.block_until_ready(out)

    ref = _reference(x, wq, wk, wv)
    assert out.shape == (B, T, H * d_out), out.shape
    # Tolerance relaxed vs 1e-5 because MXU operands are bf16 and the softmax
    # denominator uses the EUP approximate reciprocal; softmax math stays f32.
    assert jnp.allclose(out, ref, atol=2e-2, rtol=2e-2), "mismatch vs reference"

    print("KERNEL_OK")
</pallas_src>

<mosaic_0001>
module attributes {stable_mosaic.version = 11 : i64} {
  func.func @_fused_mha_kernel(%arg0: i32, %arg1: memref<1x8x32xbf16, #tpu.memory_space<vmem>>, %arg2: memref<32x192xbf16, #tpu.memory_space<vmem>>, %arg3: memref<1x8x64xf32, #tpu.memory_space<vmem>>) attributes {dimension_semantics = [#tpu.dimension_semantics<parallel>], iteration_bounds = array<i64: 2>, scalar_prefetch = 0 : i64, scratch_operands = 0 : i64, tpu.core_type = #tpu.core_type<tc>, window_params = [{transform_indices = @transform_0, window_bounds = array<i64: 1, 8, 32>}, {pipeline_mode = #tpu.pipeline_mode<synchronous>, transform_indices = @transform_1, window_bounds = array<i64: 32, 192>}, {transform_indices = @transform_2, window_bounds = array<i64: 1, 8, 64>}]} {
    %c0 = arith.constant 0 : index
    %c0_0 = arith.constant 0 : index
    %c0_1 = arith.constant 0 : index
    %0 = vector.load %arg1[%c0, %c0_0, %c0_1] : memref<1x8x32xbf16, #tpu.memory_space<vmem>>, vector<1x8x32xbf16>
    %1 = vector.shape_cast %0 : vector<1x8x32xbf16> to vector<8x32xbf16>
    %c0_2 = arith.constant 0 : index
    %c0_3 = arith.constant 0 : index
    %2 = vector.load %arg2[%c0_2, %c0_3] : memref<32x192xbf16, #tpu.memory_space<vmem>>, vector<32x192xbf16>
    %cst = arith.constant dense<0.000000e+00> : vector<8x192xf32>
    %3 = tpu.matmul %1, %2, %cst {dimension_numbers = #tpu.dot_dimension_numbers<[1], [0], [0], [1], [0, 0, 1, 1], [], []>} : vector<8x32xbf16>, vector<32x192xbf16>, vector<8x192xf32> -> vector<8x192xf32>
    %4 = vector.shape_cast %3 : vector<8x192xf32> to vector<8x12x16xf32>
    %5 = tpu.transpose %4, [1, 0, 2] : vector<8x12x16xf32> -> vector<12x8x16xf32>
    %6 = vector.extract_strided_slice %5 {offsets = [0, 0, 0], sizes = [4, 8, 16], strides = [1, 1, 1]} : vector<12x8x16xf32> to vector<4x8x16xf32>
    %7 = arith.truncf %6 : vector<4x8x16xf32> to vector<4x8x16xbf16>
    %8 = vector.extract_strided_slice %5 {offsets = [4, 0, 0], sizes = [4, 8, 16], strides = [1, 1, 1]} : vector<12x8x16xf32> to vector<4x8x16xf32>
    %9 = arith.truncf %8 : vector<4x8x16xf32> to vector<4x8x16xbf16>
    %10 = vector.extract_strided_slice %5 {offsets = [8, 0, 0], sizes = [4, 8, 16], strides = [1, 1, 1]} : vector<12x8x16xf32> to vector<4x8x16xf32>
    %11 = arith.truncf %10 : vector<4x8x16xf32> to vector<4x8x16xbf16>
    %12 = tpu.iota {dimensions = array<i32: 0>} : vector<8x8xi32>
    %13 = tpu.iota {dimensions = array<i32: 1>} : vector<8x8xi32>
    %14 = arith.cmpi sgt, %13, %12 : vector<8x8xi32>
    %cst_4 = arith.constant -1.000000e+30 : f32
    %cst_5 = arith.constant 0.000000e+00 : f32
    %15 = vector.broadcast %cst_4 : f32 to vector<8x8xf32>
    %16 = vector.broadcast %cst_5 : f32 to vector<8x8xf32>
    %17 = arith.select %14, %15, %16 : vector<8x8xi1>, vector<8x8xf32>
    "tpu.trace_start"() <{level = 10 : i32, message = "htd,hsd->hts"}> : () -> ()
    %cst_6 = arith.constant dense<0.000000e+00> : vector<4x8x8xf32>
    %18 = tpu.matmul %7, %9, %cst_6 {dimension_numbers = #tpu.dot_dimension_numbers<[2], [2], [1], [1], [0, 0, 0, 1, 1, 1], [0], [0]>} : vector<4x8x16xbf16>, vector<4x8x16xbf16>, vector<4x8x8xf32> -> vector<4x8x8xf32>
    "tpu.trace_stop"() : () -> ()
    %19 = vector.shape_cast %17 : vector<8x8xf32> to vector<1x8x8xf32>
    %20 = vector.broadcast %19 : vector<1x8x8xf32> to vector<4x8x8xf32>
    %21 = arith.addf %18, %20 : vector<4x8x8xf32>
    %cst_7 = arith.constant dense<0xFF800000> : vector<4x8xf32>
    %22 = vector.multi_reduction <maximumf>, %21, %cst_7 [2] : vector<4x8x8xf32> to vector<4x8xf32>
    %23 = vector.shape_cast %22 : vector<4x8xf32> to vector<4x8x1xf32>
    %24 = vector.broadcast %23 : vector<4x8x1xf32> to vector<4x8x8xf32>
    %25 = arith.subf %21, %24 : vector<4x8x8xf32>
    %26 = math.exp %25 : vector<4x8x8xf32>
    %cst_8 = arith.constant dense<0.000000e+00> : vector<4x8xf32>
    %27 = vector.multi_reduction <add>, %26, %cst_8 [2] : vector<4x8x8xf32> to vector<4x8xf32>
    %28 = vector.shape_cast %27 : vector<4x8xf32> to vector<4x8x1xf32>
    %29 = tpu.reciprocal %28 {approx = true} : vector<4x8x1xf32> -> vector<4x8x1xf32>
    %30 = vector.broadcast %29 : vector<4x8x1xf32> to vector<4x8x8xf32>
    %31 = arith.mulf %26, %30 : vector<4x8x8xf32>
    %32 = arith.truncf %31 : vector<4x8x8xf32> to vector<4x8x8xbf16>
    "tpu.trace_start"() <{level = 10 : i32, message = "hts,hsd->htd"}> : () -> ()
    %cst_9 = arith.constant dense<0.000000e+00> : vector<4x8x16xf32>
    %33 = tpu.matmul %32, %11, %cst_9 {dimension_numbers = #tpu.dot_dimension_numbers<[2], [1], [1], [2], [0, 0, 0, 1, 1, 2], [0], [0]>} : vector<4x8x8xbf16>, vector<4x8x16xbf16>, vector<4x8x16xf32> -> vector<4x8x16xf32>
    "tpu.trace_stop"() : () -> ()
    %34 = tpu.transpose %33, [1, 0, 2] : vector<4x8x16xf32> -> vector<8x4x16xf32>
    %35 = vector.shape_cast %34 : vector<8x4x16xf32> to vector<8x64xf32>
    %c0_10 = arith.constant 0 : index
    %c0_11 = arith.constant 0 : index
    %c0_12 = arith.constant 0 : index
    %36 = vector.load %arg3[%c0_10, %c0_11, %c0_12] : memref<1x8x64xf32, #tpu.memory_space<vmem>>, vector<1x8x64xf32>
    %37 = vector.shape_cast %36 : vector<1x8x64xf32> to vector<8x64xf32>
    %38 = vector.shape_cast %35 : vector<8x64xf32> to vector<1x8x64xf32>
    tpu.vector_store %arg3[%c0_10, %c0_11, %c0_12], %38 {strides = array<i32>} : memref<1x8x64xf32, #tpu.memory_space<vmem>>, vector<1x8x64xf32>,
    return
  }
  func.func @transform_0(%arg0: i32) -> (i32, i32, i32) {
    %c0_i32 = arith.constant 0 : i32
    %c0_i32_0 = arith.constant 0 : i32
    %c0_i32_1 = arith.constant 0 : i32
    return %arg0, %c0_i32, %c0_i32_0 : i32, i32, i32
  }
  func.func @transform_1(%arg0: i32) -> (i32, i32) {
    %c0_i32 = arith.constant 0 : i32
    %c0_i32_0 = arith.constant 0 : i32
    %c0_i32_1 = arith.constant 0 : i32
    return %c0_i32, %c0_i32_0 : i32, i32
  }
  func.func @transform_2(%arg0: i32) -> (i32, i32, i32) {
    %c0_i32 = arith.constant 0 : i32
    %c0_i32_0 = arith.constant 0 : i32
    %c0_i32_1 = arith.constant 0 : i32
    return %arg0, %c0_i32, %c0_i32_0 : i32, i32, i32
  }
}

</mosaic_0001>

<llo_original>
// kernel: tpu_custom_call.1
$region0: #{tpu_custom_call.1}
  #allocation0 [shape = 'u32[]', space=smem, size = 0x4, offset = 0x4, fixed_abs, tag = 'smem constant byte address 0x4 - core index']
  #allocation1 [shape = 'u32[72,128]{1,0:T(1,128)}', space=vmem, size = 0x9000, scoped, tag = 'internal scratch']
  %s0 = inlined_call_operand.hbm [shape: bf16[2,8,32], index: 0, kind: input, shape index: {}]
  %s1 = inlined_call_operand.hbm [shape: bf16[32,192], index: 1, kind: input, shape index: {}]
  %s2 = inlined_call_operand.hbm [shape: f32[2,8,64], index: 2, kind: output, shape index: {}]
  %s3 = sld [smem:[#allocation0]]
  $region49: #{tpu_custom_call.1} parent=0
    _
  %s5 = ssub.s32 1, %s3
  %s6 = scalar_select 0, %s5, %s3
  $region1: #{tpu_custom_call.1} parent=0
    #allocation2 [shape = 'u8[4096]{0}', space=vmem, size = 0x1000, scoped, tag = 'input window, operand 0']
    #allocation3 [shape = 's32[2]{0}', space=sflag, size = 0x8, scoped, tag = 'scoped memory for tpu_custom_call.1']
    #allocation4 [shape = 's32[2]{0}', space=sflag, size = 0x8, scoped, tag = 'scoped memory for tpu_custom_call.1']
    #allocation5 [shape = 'u8[16384]{0}', space=vmem, size = 0x4000, scoped, tag = 'input window, operand 1, single buffered']
    #allocation6 [shape = 's32[1]{0}', space=sflag, size = 0x4, scoped, tag = 'scoped memory for tpu_custom_call.1']
    #allocation7 [shape = 'u8[8192]{0}', space=vmem, size = 0x2000, scoped, tag = 'output window, operand 0']
    %7 = vsyncpa [#allocation3], 0
    %s8 = scalar_lea.sflag [#allocation3], 1
    %9 = vsyncpa %s8, 0
    %10 = vsyncpa [#allocation6], 0
    %11 = vsyncpa [#allocation4], 0
    %s12 = scalar_lea.sflag [#allocation4], 1
    %13 = vsyncpa %s12, 0
    loop: start=0, step=1, limit=4
    $region2: #{tpu_custom_call.1} parent=1 // loop_pre_header
      _
    $region3: #{tpu_custom_call.1} parent=1 // loop_header
      %s15 = sphi 0, %s19
      %p16 = scmp.ge.s32.totalorder %s15, 4
      %s25 = sphi 0, %s27
      %s28 = sphi 0, %s25
      %s29 = sphi 0, %s28
      %s45 = sphi 0, %s29
      %s49 = sphi 0, %s49
      %s51 = sphi 0, %s49
      %s52 = sphi 0, %s51
      %s66 = sphi 0, %s52
      %s72 = sphi 0, %s74
      %s75 = sphi 0, %s72
      %s76 = sphi 0, %s75
      %s92 = sphi 0, %s76
    $region4: #{tpu_custom_call.1} parent=1 // loop_header_branch
      %18 = sbr.rel (%p16) target = $region8
    $region5: #{tpu_custom_call.1} parent=1 // loop_body
      %s20 = ssub.s32 %s15, 1
      %s21 = ssub.s32 %s15, 2
      %s22 = sadd.s32 %s15, 1
      %s23 = ssub.s32 %s15, %s22
      %p24 = scmp.eq.s32.totalorder %s23, 0
      %s26 = sadd.s32 %s25, 1
      %s27 = scalar_select %p24, %s25, %s26
      %p30 = pneg %p24
      %p31 = scmp.eq.s32.totalorder %s15, 1
      %p32 = por %p30, %p31
      %p33 = scmp.ne.s32.totalorder %s25, %s28
      %p34 = scmp.eq.s32.totalorder %s15, 0
      %p35 = por %p33, %p34
      %p36 = scmp.ne.s32.totalorder %s25, %s28
      %p37 = scmp.eq.s32.totalorder %s20, 1
      %p38 = por %p36, %p37
      %p39 = scmp.ne.s32.totalorder %s28, %s29
      %p40 = scmp.eq.s32.totalorder %s20, 0
      %p41 = por %p39, %p40
      %p42 = scmp.ne.s32.totalorder %s28, %s29
      %p43 = scmp.eq.s32.totalorder %s21, 1
      %p44 = por %p42, %p43
      %p46 = scmp.ne.s32.totalorder %s29, %s45
      %p47 = scmp.eq.s32.totalorder %s21, 0
      %p48 = por %p46, %p47
      %s50 = sadd.s32 %s49, 1
      %p53 = scmp.eq.s32.totalorder %s15, 1
      %p54 = scmp.ne.s32.totalorder %s49, %s51
      %p55 = scmp.eq.s32.totalorder %s15, 0
      %p56 = por %p54, %p55
      %p57 = scmp.ne.s32.totalorder %s49, %s51
      %p58 = scmp.eq.s32.totalorder %s20, 1
      %p59 = por %p57, %p58
      %p60 = scmp.ne.s32.totalorder %s51, %s52
      %p61 = scmp.eq.s32.totalorder %s20, 0
      %p62 = por %p60, %p61
      %p63 = scmp.ne.s32.totalorder %s51, %s52
      %p64 = scmp.eq.s32.totalorder %s21, 1
      %p65 = por %p63, %p64
      %p67 = scmp.ne.s32.totalorder %s52, %s66
      %p68 = scmp.eq.s32.totalorder %s21, 0
      %p69 = por %p67, %p68
      %s70 = ssub.s32 %s15, %s22
      %p71 = scmp.eq.s32.totalorder %s70, 0
      %s73 = sadd.s32 %s72, 1
      %s74 = scalar_select %p71, %s72, %s73
      %p77 = pneg %p71
      %p78 = scmp.eq.s32.totalorder %s15, 1
      %p79 = por %p77, %p78
      %p80 = scmp.ne.s32.totalorder %s72, %s75
      %p81 = scmp.eq.s32.totalorder %s15, 0
      %p82 = por %p80, %p81
      %p83 = scmp.ne.s32.totalorder %s72, %s75
      %p84 = scmp.eq.s32.totalorder %s20, 1
      %p85 = por %p83, %p84
      %p86 = scmp.ne.s32.totalorder %s75, %s76
      %p87 = scmp.eq.s32.totalorder %s20, 0
      %p88 = por %p86, %p87
      %p89 = scmp.ne.s32.totalorder %s75, %s76
      %p90 = scmp.eq.s32.totalorder %s21, 1
      %p91 = por %p89, %p90
      %p93 = scmp.ne.s32.totalorder %s76, %s92
      %p94 = scmp.eq.s32.totalorder %s21, 0
      %p95 = por %p93, %p94
      %p96 = scmp.le.s32.totalorder 1, %s15
      %p97 = scmp.lt.s32.totalorder %s15, 3
      %p98 = pnand %p96, %p97
      %p99 = pneg %p98
      // Predicated region
      $region9: #{tpu_custom_call.1} parent=5 // pred_check
        _
      $region10: #{tpu_custom_call.1} parent=5 // pred_check_branch
        %101 = sbr.rel (%p98) target = $region12
      $region11: #{tpu_custom_call.1} parent=5 // pred_region
        %s102 = ssub.s32 %s15, 1
        // Predicated region
        $region13: #{tpu_custom_call.1} parent=11 // pred_check
          %p103 = pneg %p62
        $region14: #{tpu_custom_call.1} parent=11 // pred_check_branch
          %105 = sbr.rel (%p103) target = $region16
        $region15: #{tpu_custom_call.1} parent=11 // pred_region
          %107 = vsyncadd [#allocation6], 0
          %s108 = sshll.u32 %s1, 4
          %s109 = int_to_ptr.hbm [resolvable:$true] %s108
          %s110 = sshll.u32 [#allocation5], 4
          %s111 = int_to_ptr.vmem [resolvable:$true] %s110
          %116 = dma.hbm_to_vmem [thread:$0]  %s109, 512, %s111, [#allocation6], 128, 128, 8
        $region16: #{tpu_custom_call.1} parent=11 // pred_fallthru
          _
      $region12: #{tpu_custom_call.1} parent=5 // pred_fallthru
        _
      %p117 = scmp.lt.s32.totalorder %s15, 2
      // Predicated region
      $region17: #{tpu_custom_call.1} parent=5 // pred_check
        %p118 = pneg %p117
      $region18: #{tpu_custom_call.1} parent=5 // pred_check_branch
        %120 = sbr.rel (%p118) target = $region20
      $region19: #{tpu_custom_call.1} parent=5 // pred_region
        // Predicated region
        $region21: #{tpu_custom_call.1} parent=19 // pred_check
          %p121 = pneg %p35
        $region22: #{tpu_custom_call.1} parent=19 // pred_check_branch
          %123 = sbr.rel (%p121) target = $region24
        $region23: #{tpu_custom_call.1} parent=19 // pred_region
          %s124 = sand.u32 %s25, 1
          %s125 = scalar_lea.sflag [#allocation3], %s124
          %s126 = sand.u32 %s25, 1
          %s127 = smul.addr %s126, 4
          %s128 = scalar_lea.vmem [#allocation2], %s127
          %130 = vsyncadd %s125, 0
          %s131 = smul.addr %s15, 4
          %s132 = scalar_lea.hbm %s0, %s131
          %s134 = sshll.u32 %s132, 4
          %s135 = int_to_ptr.hbm [resolvable:$true] %s134
          %s136 = sshll.u32 %s128, 4
          %s137 = int_to_ptr.vmem [resolvable:$true] %s136
          %139 = dma.hbm_to_vmem [thread:$0]  %s135, 64, %s137, %s125
        $region24: #{tpu_custom_call.1} parent=19 // pred_fallthru
          _
      $region20: #{tpu_custom_call.1} parent=5 // pred_fallthru
        _
      %p140 = scmp.le.s32.totalorder 1, %s15
      %p141 = scmp.lt.s32.totalorder %s15, 3
      %p142 = pnand %p140, %p141
      %p143 = pneg %p142
      // Predicated region
      $region25: #{tpu_custom_call.1} parent=5 // pred_check
        _
      $region26: #{tpu_custom_call.1} parent=5 // pred_check_branch
        %145 = sbr.rel (%p142) target = $region28
      $region27: #{tpu_custom_call.1} parent=5 // pred_region
        %s146 = ssub.s32 %s15, 1
        %s147 = sand.u32 %s28, 1
        %s148 = scalar_lea.sflag [#allocation3], %s147
        %s149 = sand.u32 %s28, 1
        %s150 = smul.addr %s149, 4
        %s151 = scalar_lea.vmem [#allocation2], %s150
        // Predicated region
        $region29: #{tpu_custom_call.1} parent=27 // pred_check
          %p152 = pneg %p41
        $region30: #{tpu_custom_call.1} parent=27 // pred_check_branch
          %154 = sbr.rel (%p152) target = $region32
        $region31: #{tpu_custom_call.1} parent=27 // pred_region
          %156 = dma.done %s148, 64
        $region32: #{tpu_custom_call.1} parent=27 // pred_fallthru
          _
        // Predicated region
        $region33: #{tpu_custom_call.1} parent=27 // pred_check
          %p157 = pneg %p62
        $region34: #{tpu_custom_call.1} parent=27 // pred_check_branch
          %159 = sbr.rel (%p157) target = $region36
        $region35: #{tpu_custom_call.1} parent=27 // pred_region
          %161 = dma.done [#allocation6], 512
        $region36: #{tpu_custom_call.1} parent=27 // pred_fallthru
          _
        %s162 = sand.u32 %s28, 1
        %s163 = scalar_lea.sflag [#allocation3], %s162
        %s164 = sand.u32 %s28, 1
        %s165 = smul.addr %s164, 4
        %s166 = scalar_lea.vmem [#allocation2], %s165
        %p167 = pneg %p41
        %p168 = pneg %p38
        %p169 = pneg %p62
        %p170 = pneg %p59
        %p171 = pneg %p88
        %p172 = pneg %p85
        %s173 = sand.u32 %s75, 1
        %s174 = scalar_lea.sflag [#allocation4], %s173
        %s175 = sand.u32 %s75, 1
        %s176 = smul.addr %s175, 8
        %s177 = scalar_lea.vmem [#allocation7], %s176
        %v179 = vld [vmem:[%s151] sm:$0xf]
        %v180 = vld [vmem:[#allocation5] sm:$0xff]
        %v181 = vld [vmem:[#allocation5 + $0x8] sm:$0xff]
        %v182 = vld [vmem:[#allocation5 + $0x10] sm:$0xff]
        %v183 = vld [vmem:[#allocation5 + $0x18] sm:$0xff]
        %v188 = vunpack.c.l.b16 %v180
        %v189 = vunpack.c.h.b16 %v180
        %v190 = vunpack.c.l.b16 %v181
        %v191 = vunpack.c.h.b16 %v181
        %v192 = vunpack.c.l.b16 %v182
        %v193 = vunpack.c.h.b16 %v182
        %v194 = vunpack.c.l.b16 %v183
        %v195 = vunpack.c.h.b16 %v183
        %v196 = vpack.c.b16 %v190, %v188
        %v197 = vpack.c.b16 %v191, %v189
        %v198 = vpack.c.b16 %v194, %v192
        %v199 = vpack.c.b16 %v195, %v193
        %vm204 = vcmask 261120
        %v206 = vsel %vm204, %v179, 0
        %208 = vmatpush.bf16.msra.mxu0 0
        %209 = vmatpush.bf16.msra.mxu0 0
        %210 = vmatpush.bf16.msra.mxu0 0
        %211 = vmatpush.bf16.msra.mxu0 0
        %212 = vmatpush.bf16.msra.mxu0 0
        %213 = vmatpush.bf16.msra.mxu0 0
        %214 = vmatpush.bf16.msra.mxu0 %v198
        %215 = vmatpush.bf16.msra.mxu0 %v196
        %216 = vmatmul.bf16.gmra.mxu0 %v206
        %v217 = vpop.f32.mrf.mxu0
        %v218 = vadd.f32 0.0, %v217
        %v219 = vpop.f32.mrf.mxu0
        %220 = vdwg.mxu0
        %221 = vmatpush.bf16.msra.mxu0 0
        %222 = vmatpush.bf16.msra.mxu0 0
        %223 = vmatpush.bf16.msra.mxu0 0
        %224 = vmatpush.bf16.msra.mxu0 0
        %225 = vmatpush.bf16.msra.mxu0 0
        %226 = vmatpush.bf16.msra.mxu0 0
        %227 = vmatpush.bf16.msra.mxu0 %v199
        %228 = vmatpush.bf16.msra.mxu0 %v197
        %229 = vmatmul.bf16.gmra.mxu0 %v206
        %v230 = vpop.f32.mrf.mxu0
        %v231 = vadd.f32 0.0, %v230
        %v232 = vpop.f32.mrf.mxu0
        %233 = vdwg.mxu0
        %235 = vrot.lane.b32.xlu0 %v218, 112
        %v236 = vpop.permute.xlu0 %235
        %238 = vrot.lane.b32.xlu0 %v218, 96
        %v239 = vpop.permute.xlu0 %238
        %241 = vrot.lane.b32.xlu0 %v218, 80
        %v242 = vpop.permute.xlu0 %241
        %244 = vrot.lane.b32.xlu0 %v218, 64
        %v245 = vpop.permute.xlu0 %244
        %247 = vrot.lane.b32.xlu0 %v218, 48
        %v248 = vpop.permute.xlu0 %247
        %250 = vrot.lane.b32.xlu0 %v218, 32
        %v251 = vpop.permute.xlu0 %250
        %253 = vrot.lane.b32.xlu0 %v218, 16
        %v254 = vpop.permute.xlu0 %253
        %257 = vrot.lane.b32.xlu0 %v231, 112
        %v258 = vpop.permute.xlu0 %257
        %260 = vrot.lane.b32.xlu0 %v231, 96
        %v261 = vpop.permute.xlu0 %260
        %263 = vrot.lane.b32.xlu0 %v231, 80
        %v264 = vpop.permute.xlu0 %263
        %v266 = vrot.slane %v239, 4
        %vm267 = vcmask 1047556
        %v268 = vsel %vm267, %v266, %v218
        %v269 = vrot.slane %v218, 4
        %v270 = vsel %vm267, %v239, %v269
        %v272 = vunpack.c.l.s4 1983009808
        %v273 = vunpack.c.0.s8 %v272
        %v274 = vperm.slane %v268, %v273
        %v276 = vunpack.c.l.s4 1983009808
        %v277 = vunpack.c.0.s8 %v276
        %v278 = vperm.slane %v270, %v277
        %v279 = vrot.slane %v242, 4
        %v280 = vsel %vm267, %v279, %v236
        %v281 = vrot.slane %v236, 4
        %v282 = vsel %vm267, %v242, %v281
        %v284 = vunpack.c.l.s4 1983009808
        %v285 = vunpack.c.0.s8 %v284
        %v286 = vperm.slane %v280, %v285
        %v288 = vunpack.c.l.s4 1983009808
        %v289 = vunpack.c.0.s8 %v288
        %v290 = vperm.slane %v282, %v289
        %v291 = vrot.slane %v251, 4
        %v292 = vsel %vm267, %v291, %v245
        %v293 = vrot.slane %v245, 4
        %v294 = vsel %vm267, %v251, %v293
        %v296 = vunpack.c.l.s4 1983009808
        %v297 = vunpack.c.0.s8 %v296
        %v298 = vperm.slane %v292, %v297
        %v300 = vunpack.c.l.s4 1983009808
        %v301 = vunpack.c.0.s8 %v300
        %v302 = vperm.slane %v294, %v301
        %v303 = vrot.slane %v254, 4
        %v304 = vsel %vm267, %v303, %v248
        %v305 = vrot.slane %v248, 4
        %v306 = vsel %vm267, %v254, %v305
        %v308 = vunpack.c.l.s4 1983009808
        %v309 = vunpack.c.0.s8 %v308
        %v310 = vperm.slane %v304, %v309
        %v312 = vunpack.c.l.s4 1983009808
        %v313 = vunpack.c.0.s8 %v312
        %v314 = vperm.slane %v306, %v313
        %v315 = vrot.slane %v286, 4
        %v316 = vsel %vm267, %v315, %v274
        %v317 = vrot.slane %v274, 4
        %v318 = vsel %vm267, %v286, %v317
        %v320 = vunpack.c.l.s4 1934713408
        %v321 = vunpack.c.0.s8 %v320
        %v322 = vperm.slane %v316, %v321
        %v324 = vunpack.c.l.s4 1934713408
        %v325 = vunpack.c.0.s8 %v324
        %v326 = vperm.slane %v318, %v325
        %v327 = vrot.slane %v290, 4
        %v328 = vsel %vm267, %v327, %v278
        %v329 = vrot.slane %v278, 4
        %v330 = vsel %vm267, %v290, %v329
        %v332 = vunpack.c.l.s4 1934713408
        %v333 = vunpack.c.0.s8 %v332
        %v334 = vperm.slane %v328, %v333
        %v336 = vunpack.c.l.s4 1934713408
        %v337 = vunpack.c.0.s8 %v336
        %v338 = vperm.slane %v330, %v337
        %v339 = vrot.slane %v310, 4
        %v340 = vsel %vm267, %v339, %v298
        %v341 = vrot.slane %v298, 4
        %v342 = vsel %vm267, %v310, %v341
        %v344 = vunpack.c.l.s4 1934713408
        %v345 = vunpack.c.0.s8 %v344
        %v346 = vperm.slane %v340, %v345
        %v348 = vunpack.c.l.s4 1934713408
        %v349 = vunpack.c.0.s8 %v348
        %v350 = vperm.slane %v342, %v349
        %v351 = vrot.slane %v314, 4
        %v352 = vsel %vm267, %v351, %v302
        %v353 = vrot.slane %v302, 4
        %v354 = vsel %vm267, %v314, %v353
        %v356 = vunpack.c.l.s4 1934713408
        %v357 = vunpack.c.0.s8 %v356
        %v358 = vperm.slane %v352, %v357
        %v360 = vunpack.c.l.s4 1934713408
        %v361 = vunpack.c.0.s8 %v360
        %v362 = vperm.slane %v354, %v361
        %v363 = vrot.slane %v346, 4
        %v364 = vsel %vm267, %v363, %v322
        %v365 = vrot.slane %v322, 4
        %v366 = vsel %vm267, %v346, %v365
        %v367 = vrot.slane %v350, 4
        %v368 = vsel %vm267, %v367, %v326
        %v369 = vrot.slane %v326, 4
        %v370 = vsel %vm267, %v350, %v369
        %v371 = vrot.slane %v358, 4
        %v372 = vsel %vm267, %v371, %v334
        %v373 = vrot.slane %v334, 4
        %v374 = vsel %vm267, %v358, %v373
        %v375 = vrot.slane %v362, 4
        %v376 = vsel %vm267, %v375, %v338
        %v377 = vrot.slane %v338, 4
        %v378 = vsel %vm267, %v362, %v377
        %v379 = vrot.slane %v261, 4
        %v380 = vsel %vm267, %v379, %v231
        %v381 = vrot.slane %v231, 4
        %v382 = vsel %vm267, %v261, %v381
        %v384 = vunpack.c.l.s4 1983009808
        %v385 = vunpack.c.0.s8 %v384
        %v386 = vperm.slane %v380, %v385
        %v388 = vunpack.c.l.s4 1983009808
        %v389 = vunpack.c.0.s8 %v388
        %v390 = vperm.slane %v382, %v389
        %v391 = vrot.slane %v264, 4
        %v392 = vsel %vm267, %v391, %v258
        %v393 = vrot.slane %v258, 4
        %v394 = vsel %vm267, %v264, %v393
        %v396 = vunpack.c.l.s4 1983009808
        %v397 = vunpack.c.0.s8 %v396
        %v398 = vperm.slane %v392, %v397
        %v400 = vunpack.c.l.s4 1983009808
        %v401 = vunpack.c.0.s8 %v400
        %v402 = vperm.slane %v394, %v401
        %v403 = vrot.slane %v398, 4
        %v404 = vsel %vm267, %v403, %v386
        %v405 = vrot.slane %v386, 4
        %v406 = vsel %vm267, %v398, %v405
        %v408 = vunpack.c.l.s4 1934713408
        %v409 = vunpack.c.0.s8 %v408
        %v410 = vperm.slane %v404, %v409
        %v412 = vunpack.c.l.s4 1934713408
        %v413 = vunpack.c.0.s8 %v412
        %v414 = vperm.slane %v406, %v413
        %v415 = vrot.slane %v402, 4
        %v416 = vsel %vm267, %v415, %v390
        %v417 = vrot.slane %v390, 4
        %v418 = vsel %vm267, %v402, %v417
        %v420 = vunpack.c.l.s4 1934713408
        %v421 = vunpack.c.0.s8 %v420
        %v422 = vperm.slane %v416, %v421
        %v424 = vunpack.c.l.s4 1934713408
        %v425 = vunpack.c.0.s8 %v424
        %v426 = vperm.slane %v418, %v425
        %v427 = vrot.slane %v410, 4
        %v428 = vsel %vm267, 0.0, %v427
        %v429 = vrot.slane %v414, 4
        %v430 = vsel %vm267, 0.0, %v429
        %v431 = vrot.slane %v422, 4
        %v432 = vsel %vm267, 0.0, %v431
        %v433 = vrot.slane %v426, 4
        %v434 = vsel %vm267, 0.0, %v433
        %v435 = vrot.slane %v368, 4
        %v436 = vsel %vm267, %v435, %v364
        %v437 = vrot.slane %v364, 4
        %v438 = vsel %vm267, %v368, %v437
        %v440 = vunpack.c.l.s4 1983009808
        %v441 = vunpack.c.0.s8 %v440
        %v442 = vperm.slane %v436, %v441
        %v444 = vunpack.c.l.s4 1983009808
        %v445 = vunpack.c.0.s8 %v444
        %v446 = vperm.slane %v438, %v445
        %v447 = vrot.slane %v370, 4
        %v448 = vsel %vm267, %v447, %v366
        %v449 = vrot.slane %v366, 4
        %v450 = vsel %vm267, %v370, %v449
        %v452 = vunpack.c.l.s4 1983009808
        %v453 = vunpack.c.0.s8 %v452
        %v454 = vperm.slane %v448, %v453
        %v456 = vunpack.c.l.s4 1983009808
        %v457 = vunpack.c.0.s8 %v456
        %v458 = vperm.slane %v450, %v457
        %v459 = vrot.slane %v376, 4
        %v460 = vsel %vm267, %v459, %v372
        %v461 = vrot.slane %v372, 4
        %v462 = vsel %vm267, %v376, %v461
        %v464 = vunpack.c.l.s4 1983009808
        %v465 = vunpack.c.0.s8 %v464
        %v466 = vperm.slane %v460, %v465
        %v468 = vunpack.c.l.s4 1983009808
        %v469 = vunpack.c.0.s8 %v468
        %v470 = vperm.slane %v462, %v469
        %v471 = vrot.slane %v378, 4
        %v472 = vsel %vm267, %v471, %v374
        %v473 = vrot.slane %v374, 4
        %v474 = vsel %vm267, %v378, %v473
        %v476 = vunpack.c.l.s4 1983009808
        %v477 = vunpack.c.0.s8 %v476
        %v478 = vperm.slane %v472, %v477
        %v480 = vunpack.c.l.s4 1983009808
        %v481 = vunpack.c.0.s8 %v480
        %v482 = vperm.slane %v474, %v481
        %v483 = vrot.slane %v454, 4
        %v484 = vsel %vm267, %v483, %v442
        %v485 = vrot.slane %v442, 4
        %v486 = vsel %vm267, %v454, %v485
        %v488 = vunpack.c.l.s4 1934713408
        %v489 = vunpack.c.0.s8 %v488
        %v490 = vperm.slane %v484, %v489
        %v492 = vunpack.c.l.s4 1934713408
        %v493 = vunpack.c.0.s8 %v492
        %v494 = vperm.slane %v486, %v493
        %v495 = vrot.slane %v458, 4
        %v496 = vsel %vm267, %v495, %v446
        %v497 = vrot.slane %v446, 4
        %v498 = vsel %vm267, %v458, %v497
        %v500 = vunpack.c.l.s4 1934713408
        %v501 = vunpack.c.0.s8 %v500
        %v502 = vperm.slane %v496, %v501
        %v504 = vunpack.c.l.s4 1934713408
        %v505 = vunpack.c.0.s8 %v504
        %v506 = vperm.slane %v498, %v505
        %v507 = vrot.slane %v478, 4
        %v508 = vsel %vm267, %v507, %v466
        %v509 = vrot.slane %v466, 4
        %v510 = vsel %vm267, %v478, %v509
        %v512 = vunpack.c.l.s4 1934713408
        %v513 = vunpack.c.0.s8 %v512
        %v514 = vperm.slane %v508, %v513
        %v516 = vunpack.c.l.s4 1934713408
        %v517 = vunpack.c.0.s8 %v516
        %v518 = vperm.slane %v510, %v517
        %v519 = vrot.slane %v482, 4
        %v520 = vsel %vm267, %v519, %v470
        %v521 = vrot.slane %v470, 4
        %v522 = vsel %vm267, %v482, %v521
        %v524 = vunpack.c.l.s4 1934713408
        %v525 = vunpack.c.0.s8 %v524
        %v526 = vperm.slane %v520, %v525
        %v528 = vunpack.c.l.s4 1934713408
        %v529 = vunpack.c.0.s8 %v528
        %v530 = vperm.slane %v522, %v529
        %v531 = vrot.slane %v514, 4
        %v532 = vsel %vm267, %v531, %v490
        %v533 = vrot.slane %v490, 4
        %v534 = vsel %vm267, %v514, %v533
        %v535 = vrot.slane %v518, 4
        %v536 = vsel %vm267, %v535, %v494
        %v537 = vrot.slane %v494, 4
        %v538 = vsel %vm267, %v518, %v537
        %v539 = vrot.slane %v526, 4
        %v540 = vsel %vm267, %v539, %v502
        %v541 = vrot.slane %v502, 4
        %v542 = vsel %vm267, %v526, %v541
        %v543 = vrot.slane %v530, 4
        %v544 = vsel %vm267, %v543, %v506
        %v545 = vrot.slane %v506, 4
        %v546 = vsel %vm267, %v530, %v545
        %v547 = vsel %vm267, %v429, %v410
        %v549 = vunpack.c.l.s4 1983009808
        %v550 = vunpack.c.0.s8 %v549
        %v551 = vperm.slane %v547, %v550
        %v552 = vrot.slane %v430, 4
        %v553 = vsel %vm267, %v552, %v428
        %v555 = vunpack.c.l.s4 1983009808
        %v556 = vunpack.c.0.s8 %v555
        %v557 = vperm.slane %v553, %v556
        %v558 = vsel %vm267, %v433, %v422
        %v560 = vunpack.c.l.s4 1983009808
        %v561 = vunpack.c.0.s8 %v560
        %v562 = vperm.slane %v558, %v561
        %v563 = vrot.slane %v434, 4
        %v564 = vsel %vm267, %v563, %v432
        %v566 = vunpack.c.l.s4 1983009808
        %v567 = vunpack.c.0.s8 %v566
        %v568 = vperm.slane %v564, %v567
        %v569 = vrot.slane %v557, 4
        %v570 = vsel %vm267, %v569, %v551
        %v571 = vrot.slane %v551, 4
        %v572 = vsel %vm267, %v557, %v571
        %v574 = vunpack.c.l.s4 1934713408
        %v575 = vunpack.c.0.s8 %v574
        %v576 = vperm.slane %v570, %v575
        %v578 = vunpack.c.l.s4 1934713408
        %v579 = vunpack.c.0.s8 %v578
        %v580 = vperm.slane %v572, %v579
        %v581 = vrot.slane %v568, 4
        %v582 = vsel %vm267, %v581, %v562
        %v583 = vrot.slane %v562, 4
        %v584 = vsel %vm267, %v568, %v583
        %v586 = vunpack.c.l.s4 1934713408
        %v587 = vunpack.c.0.s8 %v586
        %v588 = vperm.slane %v582, %v587
        %v590 = vunpack.c.l.s4 1934713408
        %v591 = vunpack.c.0.s8 %v590
        %v592 = vperm.slane %v584, %v591
        %v593 = vrot.slane %v588, 4
        %v594 = vsel %vm267, %v593, %v576
        %v595 = vrot.slane %v576, 4
        %v596 = vsel %vm267, %v588, %v595
        %v597 = vrot.slane %v592, 4
        %v598 = vsel %vm267, %v597, %v580
        %v599 = vrot.slane %v580, 4
        %v600 = vsel %vm267, %v592, %v599
        %v601 = vpack.c.bf16 %v532, %v532
        %v602 = vpack.c.bf16 %v534, %v534
        %v603 = vpack.c.bf16 %v536, %v536
        %v604 = vpack.c.bf16 %v538, %v538
        %v605 = vpack.c.bf16 %v540, %v540
        %v606 = vpack.c.bf16 %v542, %v542
        %v607 = vpack.c.bf16 %v544, %v544
        %v608 = vpack.c.bf16 %v546, %v546
        %v609 = vpack.c.bf16 %v594, %v594
        %v610 = vpack.c.bf16 %v596, %v596
        %v611 = vpack.c.bf16 %v598, %v598
        %v612 = vpack.c.bf16 %v600, %v600
        %v613 = vlaneseq
        %v614 = vshrl.u32 %v613, 7
        %v615 = vlaneseq
        %v616 = vand.u32 %v615, 127
        %vm617 = vcmp.gt.s32.totalorder %v616, %v614
        %v618 = vsel %vm617, -1e+30, 0.0
        %vm619 = vcmask 130048
        %v621 = vsel %vm619, %v601, 0
        %v624 = vsel %vm619, %v605, 0
        %626 = vmatpush.bf16.xpose.msra.mxu0 0
        %627 = vmatpush.bf16.xpose.msra.mxu0 0
        %628 = vmatpush.bf16.xpose.msra.mxu0 0
        %629 = vmatpush.bf16.xpose.msra.mxu0 0
        %630 = vmatpush.bf16.xpose.msra.mxu0 0
        %631 = vmatpush.bf16.xpose.msra.mxu0 0
        %632 = vmatpush.bf16.xpose.msra.mxu0 0
        %633 = vmatpush.bf16.xpose.msra.mxu0 %v624
        %634 = vmatmul.bf16.gmra.mxu0 %v621
        %v635 = vpop.f32.mrf.mxu0
        %v636 = vadd.f32 %v618, %v635
        %v637 = vpop.f32.mrf.mxu0
        %638 = vdwg.mxu0
        %v640 = vsel %vm619, %v602, 0
        %v643 = vsel %vm619, %v606, 0
        %645 = vmatpush.bf16.xpose.msra.mxu0 0
        %646 = vmatpush.bf16.xpose.msra.mxu0 0
        %647 = vmatpush.bf16.xpose.msra.mxu0 0
        %648 = vmatpush.bf16.xpose.msra.mxu0 0
        %649 = vmatpush.bf16.xpose.msra.mxu0 0
        %650 = vmatpush.bf16.xpose.msra.mxu0 0
        %651 = vmatpush.bf16.xpose.msra.mxu0 0
        %652 = vmatpush.bf16.xpose.msra.mxu0 %v643
        %653 = vmatmul.bf16.gmra.mxu0 %v640
        %v654 = vpop.f32.mrf.mxu0
        %v655 = vadd.f32 %v618, %v654
        %v656 = vpop.f32.mrf.mxu0
        %657 = vdwg.mxu0
        %v659 = vsel %vm619, %v603, 0
        %v662 = vsel %vm619, %v607, 0
        %664 = vmatpush.bf16.xpose.msra.mxu0 0
        %665 = vmatpush.bf16.xpose.msra.mxu0 0
        %666 = vmatpush.bf16.xpose.msra.mxu0 0
        %667 = vmatpush.bf16.xpose.msra.mxu0 0
        %668 = vmatpush.bf16.xpose.msra.mxu0 0
        %669 = vmatpush.bf16.xpose.msra.mxu0 0
        %670 = vmatpush.bf16.xpose.msra.mxu0 0
        %671 = vmatpush.bf16.xpose.msra.mxu0 %v662
        %672 = vmatmul.bf16.gmra.mxu0 %v659
        %v673 = vpop.f32.mrf.mxu0
        %v674 = vadd.f32 %v618, %v673
        %v675 = vpop.f32.mrf.mxu0
        %676 = vdwg.mxu0
        %v678 = vsel %vm619, %v604, 0
        %v681 = vsel %vm619, %v608, 0
        %683 = vmatpush.bf16.xpose.msra.mxu0 0
        %684 = vmatpush.bf16.xpose.msra.mxu0 0
        %685 = vmatpush.bf16.xpose.msra.mxu0 0
        %686 = vmatpush.bf16.xpose.msra.mxu0 0
        %687 = vmatpush.bf16.xpose.msra.mxu0 0
        %688 = vmatpush.bf16.xpose.msra.mxu0 0
        %689 = vmatpush.bf16.xpose.msra.mxu0 0
        %690 = vmatpush.bf16.xpose.msra.mxu0 %v681
        %691 = vmatmul.bf16.gmra.mxu0 %v678
        %v692 = vpop.f32.mrf.mxu0
        %v693 = vadd.f32 %v618, %v692
        %v694 = vpop.f32.mrf.mxu0
        %695 = vdwg.mxu0
        %vm696 = vcmask 64512
        %v697 = vsel %vm696, %v636, -inf
        %698 = vmax.xlane.f32.xlu0 %v697
        %v699 = vpop.xlane.xlu0 %698
        %v700 = vsel %vm696, %v655, -inf
        %701 = vmax.xlane.f32.xlu0 %v700
        %v702 = vpop.xlane.xlu0 %701
        %v703 = vsel %vm696, %v674, -inf
        %704 = vmax.xlane.f32.xlu0 %v703
        %v705 = vpop.xlane.xlu0 %704
        %v706 = vsel %vm696, %v693, -inf
        %707 = vmax.xlane.f32.xlu0 %v706
        %v708 = vpop.xlane.xlu0 %707
        %v709 = vsub.f32 %v636, %v699
        %v710 = vsub.f32 %v655, %v702
        %v711 = vsub.f32 %v674, %v705
        %v712 = vsub.f32 %v693, %v708
        %v713 = vmul.f32 %v709, 1.442695
        %v714 = vpow.pop %v713
        %v715 = vmul.f32 %v710, 1.442695
        %v716 = vpow.pop %v715
        %v717 = vmul.f32 %v711, 1.442695
        %v718 = vpow.pop %v717
        %v719 = vmul.f32 %v712, 1.442695
        %v720 = vpow.pop %v719
        %v721 = vsel %vm696, %v714, 0.0
        %722 = vadd.xlane.f32.xlu0 %v721
        %v723 = vpop.xlane.xlu0 %722
        %v724 = vsel %vm696, %v716, 0.0
        %725 = vadd.xlane.f32.xlu0 %v724
        %v726 = vpop.xlane.xlu0 %725
        %v727 = vsel %vm696, %v718, 0.0
        %728 = vadd.xlane.f32.xlu0 %v727
        %v729 = vpop.xlane.xlu0 %728
        %v730 = vsel %vm696, %v720, 0.0
        %731 = vadd.xlane.f32.xlu0 %v730
        %v732 = vpop.xlane.xlu0 %731
        %v733 = vrcp.pop %v723
        %v734 = vrcp.pop %v726
        %v735 = vrcp.pop %v729
        %v736 = vrcp.pop %v732
        %v737 = vmul.f32 %v714, %v733
        %v738 = vmul.f32 %v716, %v734
        %v739 = vmul.f32 %v718, %v735
        %v740 = vmul.f32 %v720, %v736
        %v741 = vpack.c.bf16 %v737, %v737
        %v742 = vpack.c.bf16 %v738, %v738
        %v743 = vpack.c.bf16 %v739, %v739
        %v744 = vpack.c.bf16 %v740, %v740
        %v746 = vsel %vm696, %v741, 0
        %vm748 = vcmask 1043456
        %v750 = vsel %vm748, %v609, 0
        %752 = vmatpush.bf16.msra.mxu0 0
        %753 = vmatpush.bf16.msra.mxu0 0
        %754 = vmatpush.bf16.msra.mxu0 0
        %755 = vmatpush.bf16.msra.mxu0 0
        %756 = vmatpush.bf16.msra.mxu0 0
        %757 = vmatpush.bf16.msra.mxu0 0
        %758 = vmatpush.bf16.msra.mxu0 0
        %759 = vmatpush.bf16.msra.mxu0 %v750
        %760 = vmatmul.bf16.gmra.mxu0 %v746
        %v761 = vpop.f32.mrf.mxu0
        %v762 = vadd.f32 0.0, %v761
        %v763 = vpop.f32.mrf.mxu0
        %764 = vdwg.mxu0
        %v766 = vsel %vm696, %v742, 0
        %v769 = vsel %vm748, %v610, 0
        %771 = vmatpush.bf16.msra.mxu0 0
        %772 = vmatpush.bf16.msra.mxu0 0
        %773 = vmatpush.bf16.msra.mxu0 0
        %774 = vmatpush.bf16.msra.mxu0 0
        %775 = vmatpush.bf16.msra.mxu0 0
        %776 = vmatpush.bf16.msra.mxu0 0
        %777 = vmatpush.bf16.msra.mxu0 0
        %778 = vmatpush.bf16.msra.mxu0 %v769
        %779 = vmatmul.bf16.gmra.mxu0 %v766
        %v780 = vpop.f32.mrf.mxu0
        %v781 = vadd.f32 0.0, %v780
        %v782 = vpop.f32.mrf.mxu0
        %783 = vdwg.mxu0
        %v785 = vsel %vm696, %v743, 0
        %v788 = vsel %vm748, %v611, 0
        %790 = vmatpush.bf16.msra.mxu0 0
        %791 = vmatpush.bf16.msra.mxu0 0
        %792 = vmatpush.bf16.msra.mxu0 0
        %793 = vmatpush.bf16.msra.mxu0 0
        %794 = vmatpush.bf16.msra.mxu0 0
        %795 = vmatpush.bf16.msra.mxu0 0
        %796 = vmatpush.bf16.msra.mxu0 0
        %797 = vmatpush.bf16.msra.mxu0 %v788
        %798 = vmatmul.bf16.gmra.mxu0 %v785
        %v799 = vpop.f32.mrf.mxu0
        %v800 = vadd.f32 0.0, %v799
        %v801 = vpop.f32.mrf.mxu0
        %802 = vdwg.mxu0
        %v804 = vsel %vm696, %v744, 0
        %v807 = vsel %vm748, %v612, 0
        %809 = vmatpush.bf16.msra.mxu0 0
        %810 = vmatpush.bf16.msra.mxu0 0
        %811 = vmatpush.bf16.msra.mxu0 0
        %812 = vmatpush.bf16.msra.mxu0 0
        %813 = vmatpush.bf16.msra.mxu0 0
        %814 = vmatpush.bf16.msra.mxu0 0
        %815 = vmatpush.bf16.msra.mxu0 0
        %816 = vmatpush.bf16.msra.mxu0 %v807
        %817 = vmatmul.bf16.gmra.mxu0 %v804
        %v818 = vpop.f32.mrf.mxu0
        %v819 = vadd.f32 0.0, %v818
        %v820 = vpop.f32.mrf.mxu0
        %821 = vdwg.mxu0
        %v822 = vrot.slane %v800, 4
        %v823 = vsel %vm267, %v822, %v762
        %v824 = vrot.slane %v762, 4
        %v825 = vsel %vm267, %v800, %v824
        %v827 = vunpack.c.l.s4 1983009808
        %v828 = vunpack.c.0.s8 %v827
        %v829 = vperm.slane %v823, %v828
        %v831 = vunpack.c.l.s4 1983009808
        %v832 = vunpack.c.0.s8 %v831
        %v833 = vperm.slane %v825, %v832
        %v834 = vrot.slane %v819, 4
        %v835 = vsel %vm267, %v834, %v781
        %v836 = vrot.slane %v781, 4
        %v837 = vsel %vm267, %v819, %v836
        %v839 = vunpack.c.l.s4 1983009808
        %v840 = vunpack.c.0.s8 %v839
        %v841 = vperm.slane %v835, %v840
        %v843 = vunpack.c.l.s4 1983009808
        %v844 = vunpack.c.0.s8 %v843
        %v845 = vperm.slane %v837, %v844
        %v846 = vrot.slane %v841, 4
        %v847 = vsel %vm267, %v846, %v829
        %v848 = vrot.slane %v829, 4
        %v849 = vsel %vm267, %v841, %v848
        %v851 = vunpack.c.l.s4 1934713408
        %v852 = vunpack.c.0.s8 %v851
        %v853 = vperm.slane %v847, %v852
        %v855 = vunpack.c.l.s4 1934713408
        %v856 = vunpack.c.0.s8 %v855
        %v857 = vperm.slane %v849, %v856
        %v858 = vrot.slane %v845, 4
        %v859 = vsel %vm267, %v858, %v833
        %v860 = vrot.slane %v833, 4
        %v861 = vsel %vm267, %v845, %v860
        %v863 = vunpack.c.l.s4 1934713408
        %v864 = vunpack.c.0.s8 %v863
        %v865 = vperm.slane %v859, %v864
        %v867 = vunpack.c.l.s4 1934713408
        %v868 = vunpack.c.0.s8 %v867
        %v869 = vperm.slane %v861, %v868
        %v870 = vrot.slane %v853, 4
        %v871 = vsel %vm267, 0.0, %v870
        %v872 = vrot.slane %v857, 4
        %v873 = vsel %vm267, 0.0, %v872
        %v874 = vrot.slane %v865, 4
        %v875 = vsel %vm267, 0.0, %v874
        %v876 = vrot.slane %v869, 4
        %v877 = vsel %vm267, 0.0, %v876
        %v878 = vsel %vm267, %v872, %v853
        %v880 = vunpack.c.l.s4 1983009808
        %v881 = vunpack.c.0.s8 %v880
        %v882 = vperm.slane %v878, %v881
        %v883 = vrot.slane %v873, 4
        %v884 = vsel %vm267, %v883, %v871
        %v886 = vunpack.c.l.s4 1983009808
        %v887 = vunpack.c.0.s8 %v886
        %v888 = vperm.slane %v884, %v887
        %v889 = vsel %vm267, %v876, %v865
        %v891 = vunpack.c.l.s4 1983009808
        %v892 = vunpack.c.0.s8 %v891
        %v893 = vperm.slane %v889, %v892
        %v894 = vrot.slane %v877, 4
        %v895 = vsel %vm267, %v894, %v875
        %v897 = vunpack.c.l.s4 1983009808
        %v898 = vunpack.c.0.s8 %v897
        %v899 = vperm.slane %v895, %v898
        %v900 = vrot.slane %v888, 4
        %v901 = vsel %vm267, %v900, %v882
        %v902 = vrot.slane %v882, 4
        %v903 = vsel %vm267, %v888, %v902
        %v905 = vunpack.c.l.s4 1934713408
        %v906 = vunpack.c.0.s8 %v905
        %v907 = vperm.slane %v901, %v906
        %v909 = vunpack.c.l.s4 1934713408
        %v910 = vunpack.c.0.s8 %v909
        %v911 = vperm.slane %v903, %v910
        %v912 = vrot.slane %v899, 4
        %v913 = vsel %vm267, %v912, %v893
        %v914 = vrot.slane %v893, 4
        %v915 = vsel %vm267, %v899, %v914
        %v917 = vunpack.c.l.s4 1934713408
        %v918 = vunpack.c.0.s8 %v917
        %v919 = vperm.slane %v913, %v918
        %v921 = vunpack.c.l.s4 1934713408
        %v922 = vunpack.c.0.s8 %v921
        %v923 = vperm.slane %v915, %v922
        %v924 = vrot.slane %v919, 4
        %v925 = vsel %vm267, %v924, %v907
        %v926 = vrot.slane %v907, 4
        %v927 = vsel %vm267, %v919, %v926
        %v928 = vrot.slane %v923, 4
        %v929 = vsel %vm267, %v928, %v911
        %v930 = vrot.slane %v911, 4
        %v931 = vsel %vm267, %v923, %v930
        %933 = vrot.lane.b32.xlu0 %v927, 16
        %v934 = vpop.permute.xlu0 %933
        %937 = vrot.lane.b32.xlu0 %v929, 32
        %v938 = vpop.permute.xlu0 %937
        %941 = vrot.lane.b32.xlu0 %v931, 48
        %v942 = vpop.permute.xlu0 %941
        %v944 = vsel %vm619, %v925, %v934
        %v945 = vsel %vm204, %v944, %v938
        %vm946 = vcmask 392192
        %v947 = vsel %vm946, %v945, %v942
        %vm948 = vcmask 523264
        %949 = vst.msk [vmem:[%s177] sm:$0xff] %vm948, %v947
        %s950 = sand.u32 %s75, 1
        %s951 = scalar_lea.sflag [#allocation4], %s950
        %s952 = sand.u32 %s75, 1
        %s953 = smul.addr %s952, 8
        %s954 = scalar_lea.vmem [#allocation7], %s953
        // Predicated region
        $region37: #{tpu_custom_call.1} parent=27 // pred_check
          %p955 = pneg %p85
        $region38: #{tpu_custom_call.1} parent=27 // pred_check_branch
          %957 = sbr.rel (%p955) target = $region40
        $region39: #{tpu_custom_call.1} parent=27 // pred_region
          %959 = vsyncadd %s951, 0
          %s960 = smul.addr %s20, 8
          %s961 = scalar_lea.hbm %s2, %s960
          %s963 = sshll.u32 %s954, 4
          %s964 = int_to_ptr.vmem [resolvable:$true] %s963
          %s965 = sshll.u32 %s961, 4
          %s966 = int_to_ptr.hbm [resolvable:$true] %s965
          %968 = dma.vmem_to_hbm [thread:$0]  %s964, 128, %s966, %s951
        $region40: #{tpu_custom_call.1} parent=27 // pred_fallthru
          _
      $region28: #{tpu_custom_call.1} parent=5 // pred_fallthru
        _
      %p969 = scmp.le.s32.totalorder 2, %s15
      // Predicated region
      $region41: #{tpu_custom_call.1} parent=5 // pred_check
        %p970 = pneg %p969
      $region42: #{tpu_custom_call.1} parent=5 // pred_check_branch
        %972 = sbr.rel (%p970) target = $region44
      $region43: #{tpu_custom_call.1} parent=5 // pred_region
        %s973 = ssub.s32 %s15, 2
        // Predicated region
        $region45: #{tpu_custom_call.1} parent=43 // pred_check
          %p974 = pneg %p91
        $region46: #{tpu_custom_call.1} parent=43 // pred_check_branch
          %976 = sbr.rel (%p974) target = $region48
        $region47: #{tpu_custom_call.1} parent=43 // pred_region
          %s977 = sand.u32 %s76, 1
          %s978 = scalar_lea.sflag [#allocation4], %s977
          %s979 = sand.u32 %s76, 1
          %s980 = smul.addr %s979, 8
          %s981 = scalar_lea.vmem [#allocation7], %s980
          %983 = dma.done %s978, 128
        $region48: #{tpu_custom_call.1} parent=43 // pred_fallthru
          _
      $region44: #{tpu_custom_call.1} parent=5 // pred_fallthru
        _
    $region6: #{tpu_custom_call.1} parent=1 // loop_footer
      %s19 = sadd.s32 1, %s15
    $region7: #{tpu_custom_call.1} parent=1 // loop_footer_branch
      %14 = sbr.rel target = $region3
    $region8: #{tpu_custom_call.1} parent=1 // loop_exit
      _
    %984 = vsyncpa [#allocation3], 1
    %s985 = scalar_lea.sflag [#allocation3], 1
    %986 = vsyncpa %s985, 1
    %987 = vsyncpa [#allocation6], 1
    %988 = vsyncpa [#allocation4], 1
    %s989 = scalar_lea.sflag [#allocation4], 1
    %990 = vsyncpa %s989, 1

</llo_original>
